<compile_context>
chip_gen: v7x
topology: tpu7x:2x2x1
jax: 0.10.0
libtpu: 0.0.40
codegen_flags: <defaults>
</compile_context>

<pallas_src>
import jax
import jax.numpy as jnp
from jax.experimental import pallas as pl
from jax.experimental.pallas import tpu as pltpu

INP, H1, H2, H3, H4, OUT = 27, 50, 100, 50, 10, 2
EPS = 1e-5
PAD = 128                                   # lane padding for every output dim

# Per-layer contraction (K) sizes, padded to sublane multiples of 8, and the
# row offset of each layer's weight block inside the stacked slab.
_K_REAL = (INP, H1, H2, H3, H4)             # 27, 50, 100, 50, 10
_K_PAD = (32, 56, 104, 56, 16)
_K_OFF = (0, 32, 88, 192, 248)
W_ROWS = 264                                # sum(_K_PAD)
N_VEC_ROWS = 16                             # rows 0-3 gamma, 4-7 beta, 8 b5


def simple_model_kernel(x_ref, w_ref, v_ref, o_ref, x_pad_ref):
    """x_ref: (B, INP)   w_ref: (264, 128)   v_ref: (16, 128)
       o_ref: (B, 128)   x_pad_ref: (B, 32) VMEM scratch."""
    B = x_ref.shape[0]
    inv_b = jnp.float32(1.0 / B)

    vec = v_ref[...]                        # (16, 128) — 8 KiB, load once

    # Fold input padding into the kernel: zero the staging buffer (scratch
    # VMEM may hold NaN/Inf) and masked-store the real lanes, then load.
    x_pad_ref[...] = jnp.zeros_like(x_pad_ref)
    x_pad_ref[:, :INP] = x_ref[...]
    h = x_pad_ref[...]                      # (B, 32), lanes >= INP exactly 0

    # Layers 1-4: Linear (bias cancelled by BN) -> BatchNorm (train) -> Tanh.
    for li in range(4):
        off, k = _K_OFF[li], _K_PAD[li]
        w = w_ref[off:off + k, :]           # (k, 128) static sublane slice
        h = jnp.dot(h, w, preferred_element_type=jnp.float32)   # (B, 128)

        gamma = vec[li:li + 1, :]
        beta = vec[4 + li:5 + li, :]
        # One-pass batch statistics (biased variance, training-mode BN).
        s1 = jnp.sum(h, axis=0, keepdims=True)
        s2 = jnp.sum(h * h, axis=0, keepdims=True)
        mu = s1 * inv_b
        var = s2 * inv_b - mu * mu
        scale = gamma * jax.lax.rsqrt(var + EPS)
        shift = beta - mu * scale
        h = jnp.tanh(h * scale + shift)
        # Padded lanes are exactly zero (gamma/beta padded with 0 -> tanh(0)),
        # so narrowing to the next layer's padded K is exact.
        h = h[:, :_K_PAD[li + 1]]

    # Layer 5: Linear with bias, no BN / activation.  Lane-dense 128-wide store.
    w5 = w_ref[_K_OFF[4]:_K_OFF[4] + _K_PAD[4], :]
    out = jnp.dot(h, w5, preferred_element_type=jnp.float32) + vec[8:9, :]
    o_ref[...] = out.astype(o_ref.dtype)


def pack_params(params):
    """One-time layout prep: transpose, pad, stack into two VMEM slabs."""
    w_slab = jnp.zeros((W_ROWS, PAD), jnp.float32)
    for li in range(5):
        w_t = params[f"w{li + 1}"].T                  # (in, out)
        fi, fo = w_t.shape
        w_slab = w_slab.at[_K_OFF[li]:_K_OFF[li] + fi, :fo].set(w_t)

    v_slab = jnp.zeros((N_VEC_ROWS, PAD), jnp.float32)
    for li, n in zip(range(4), (H1, H2, H3, H4)):
        v_slab = v_slab.at[li, :n].set(params[f"bn{li + 1}_g"])
        v_slab = v_slab.at[4 + li, :n].set(params[f"bn{li + 1}_b"])
    # Biases b1..b4 intentionally dropped (exactly cancelled by training BN).
    v_slab = v_slab.at[8, :OUT].set(params["b5"])
    return w_slab, v_slab


@jax.jit
def simple_model_forward(x, w_slab, v_slab):
    """x: (B, INP) f32.  w_slab/v_slab: outputs of pack_params (pre-computed)."""
    B = x.shape[0]
    vmem = pl.BlockSpec(memory_space=pltpu.MemorySpace.VMEM)

    flops = 2 * B * sum(k * PAD for k in _K_PAD)
    bytes_accessed = 4 * (x.size + w_slab.size + v_slab.size + B * PAD)
    out_pad = pl.pallas_call(
        simple_model_kernel,
        out_shape=jax.ShapeDtypeStruct((B, PAD), jnp.float32),
        in_specs=[vmem, vmem, vmem],
        out_specs=vmem,
        scratch_shapes=[pltpu.VMEM((B, _K_PAD[0]), jnp.float32)],
        cost_estimate=pl.CostEstimate(
            flops=flops,
            transcendentals=4 * B * PAD,
            bytes_accessed=bytes_accessed,
        ),
    )(x, w_slab, v_slab)
    # Lane-dense store happens in the kernel; this narrow slice stays inside
    # the same jit so XLA fuses it with the consumer.
    return out_pad[:, :OUT]


def init_params(key):
    """Deterministic parameter init matching the torch module's shapes."""
    dims = [(INP, H1), (H1, H2), (H2, H3), (H3, H4), (H4, OUT)]
    params = {}
    keys = jax.random.split(key, 2 * len(dims))
    for i, (fan_in, fan_out) in enumerate(dims):
        li = i + 1
        bound = 1.0 / jnp.sqrt(fan_in)
        params[f"w{li}"] = jax.random.uniform(
            keys[2 * i], (fan_out, fan_in), jnp.float32, -bound, bound
        )
        params[f"b{li}"] = jax.random.uniform(
            keys[2 * i + 1], (fan_out,), jnp.float32, -bound, bound
        )
    for li, n in zip(range(1, 5), (H1, H2, H3, H4)):
        params[f"bn{li}_g"] = jnp.ones((n,), jnp.float32)
        params[f"bn{li}_b"] = jnp.zeros((n,), jnp.float32)
    return params


def reference_forward(x, params):
    """Pure-JAX torch-faithful reference: biases included, two-pass BN stats."""
    h = x
    for li in range(1, 6):
        h = h @ params[f"w{li}"].T + params[f"b{li}"]
        if li <= 4:
            mu = jnp.mean(h, axis=0, keepdims=True)
            var = jnp.mean((h - mu) ** 2, axis=0, keepdims=True)
            h = (h - mu) * jax.lax.rsqrt(var + EPS)
            h = h * params[f"bn{li}_g"] + params[f"bn{li}_b"]
            h = jnp.tanh(h)
    return h


if __name__ == "__main__":
    key = jax.random.PRNGKey(0)
    k_param, k_x = jax.random.split(key)

    params = init_params(k_param)
    x = jax.random.normal(k_x, (8, INP), jnp.float32)  # batch=8, inp=27

    # One-time layout prep (hoisted out of the forward path).
    w_slab, v_slab = pack_params(params)
    w_slab, v_slab = jax.block_until_ready((w_slab, v_slab))

    out = simple_model_forward(x, w_slab, v_slab)
    out = jax.block_until_ready(out)

    ref = reference_forward(x, params)
    assert out.shape == (8, OUT)
    assert jnp.allclose(out, ref, atol=1e-4, rtol=1e-4), (
        f"max abs err = {jnp.max(jnp.abs(out - ref))}"
    )
    print("KERNEL_OK")
</pallas_src>

<mosaic_0001>
module attributes {stable_mosaic.version = 11 : i64} {
  func.func @simple_model_kernel(%arg0: memref<8x27xf32, #tpu.memory_space<vmem>>, %arg1: memref<264x128xf32, #tpu.memory_space<vmem>>, %arg2: memref<16x128xf32, #tpu.memory_space<vmem>>, %arg3: memref<8x128xf32, #tpu.memory_space<vmem>>, %arg4: memref<8x32xf32, #tpu.memory_space<vmem>>) attributes {dimension_semantics = [], scalar_prefetch = 0 : i64, scratch_operands = 1 : i64, tpu.core_type = #tpu.core_type<tc>} {
    %c0 = arith.constant 0 : index
    %c0_0 = arith.constant 0 : index
    %0 = vector.load %arg2[%c0, %c0_0] : memref<16x128xf32, #tpu.memory_space<vmem>>, vector<16x128xf32>
    %cst = arith.constant 0.000000e+00 : f32
    %1 = vector.broadcast %cst : f32 to vector<8x32xf32>
    %c0_1 = arith.constant 0 : index
    %c0_2 = arith.constant 0 : index
    %2 = vector.load %arg4[%c0_1, %c0_2] : memref<8x32xf32, #tpu.memory_space<vmem>>, vector<8x32xf32>
    tpu.vector_store %arg4[%c0_1, %c0_2], %1 {strides = array<i32>} : memref<8x32xf32, #tpu.memory_space<vmem>>, vector<8x32xf32>,
    %c0_3 = arith.constant 0 : index
    %c0_4 = arith.constant 0 : index
    %3 = vector.load %arg0[%c0_3, %c0_4] : memref<8x27xf32, #tpu.memory_space<vmem>>, vector<8x27xf32>
    %c0_5 = arith.constant 0 : index
    %c0_6 = arith.constant 0 : index
    %4 = vector.load %arg4[%c0_5, %c0_6] : memref<8x32xf32, #tpu.memory_space<vmem>>, vector<8x27xf32>
    tpu.vector_store %arg4[%c0_5, %c0_6], %3 {strides = array<i32>} : memref<8x32xf32, #tpu.memory_space<vmem>>, vector<8x27xf32>,
    %c0_7 = arith.constant 0 : index
    %c0_8 = arith.constant 0 : index
    %5 = vector.load %arg4[%c0_7, %c0_8] : memref<8x32xf32, #tpu.memory_space<vmem>>, vector<8x32xf32>
    %c0_9 = arith.constant 0 : index
    %c0_10 = arith.constant 0 : index
    %6 = vector.load %arg1[%c0_9, %c0_10] : memref<264x128xf32, #tpu.memory_space<vmem>>, vector<32x128xf32>
    %cst_11 = arith.constant dense<0.000000e+00> : vector<8x128xf32>
    %7 = tpu.matmul %5, %6, %cst_11 {dimension_numbers = #tpu.dot_dimension_numbers<[1], [0], [0], [1], [0, 0, 1, 1], [], []>} : vector<8x32xf32>, vector<32x128xf32>, vector<8x128xf32> -> vector<8x128xf32>
    %8 = vector.extract_strided_slice %0 {offsets = [0, 0], sizes = [1, 128], strides = [1, 1]} : vector<16x128xf32> to vector<1x128xf32>
    %9 = vector.extract_strided_slice %0 {offsets = [4, 0], sizes = [1, 128], strides = [1, 1]} : vector<16x128xf32> to vector<1x128xf32>
    %cst_12 = arith.constant dense<0.000000e+00> : vector<128xf32>
    %10 = vector.multi_reduction <add>, %7, %cst_12 [0] : vector<8x128xf32> to vector<128xf32>
    %11 = vector.shape_cast %10 : vector<128xf32> to vector<1x128xf32>
    %12 = arith.mulf %7, %7 : vector<8x128xf32>
    %cst_13 = arith.constant dense<0.000000e+00> : vector<128xf32>
    %13 = vector.multi_reduction <add>, %12, %cst_13 [0] : vector<8x128xf32> to vector<128xf32>
    %14 = vector.shape_cast %13 : vector<128xf32> to vector<1x128xf32>
    %cst_14 = arith.constant 1.250000e-01 : f32
    %15 = vector.broadcast %cst_14 : f32 to vector<1x128xf32>
    %16 = arith.mulf %11, %15 : vector<1x128xf32>
    %cst_15 = arith.constant 1.250000e-01 : f32
    %17 = vector.broadcast %cst_15 : f32 to vector<1x128xf32>
    %18 = arith.mulf %14, %17 : vector<1x128xf32>
    %19 = arith.mulf %16, %16 : vector<1x128xf32>
    %20 = arith.subf %18, %19 : vector<1x128xf32>
    %cst_16 = arith.constant 9.99999974E-6 : f32
    %21 = vector.broadcast %cst_16 : f32 to vector<1x128xf32>
    %22 = arith.addf %20, %21 : vector<1x128xf32>
    %23 = math.rsqrt %22 : vector<1x128xf32>
    %24 = arith.mulf %8, %23 : vector<1x128xf32>
    %25 = arith.mulf %16, %24 : vector<1x128xf32>
    %26 = arith.subf %9, %25 : vector<1x128xf32>
    %27 = vector.broadcast %24 : vector<1x128xf32> to vector<8x128xf32>
    %28 = arith.mulf %7, %27 : vector<8x128xf32>
    %29 = vector.broadcast %26 : vector<1x128xf32> to vector<8x128xf32>
    %30 = arith.addf %28, %29 : vector<8x128xf32>
    %31 = math.tanh %30 : vector<8x128xf32>
    %32 = vector.extract_strided_slice %31 {offsets = [0, 0], sizes = [8, 56], strides = [1, 1]} : vector<8x128xf32> to vector<8x56xf32>
    %c32 = arith.constant 32 : index
    %c0_17 = arith.constant 0 : index
    %33 = vector.load %arg1[%c32, %c0_17] : memref<264x128xf32, #tpu.memory_space<vmem>>, vector<56x128xf32>
    %cst_18 = arith.constant dense<0.000000e+00> : vector<8x128xf32>
    %34 = tpu.matmul %32, %33, %cst_18 {dimension_numbers = #tpu.dot_dimension_numbers<[1], [0], [0], [1], [0, 0, 1, 1], [], []>} : vector<8x56xf32>, vector<56x128xf32>, vector<8x128xf32> -> vector<8x128xf32>
    %35 = vector.extract_strided_slice %0 {offsets = [1, 0], sizes = [1, 128], strides = [1, 1]} : vector<16x128xf32> to vector<1x128xf32>
    %36 = vector.extract_strided_slice %0 {offsets = [5, 0], sizes = [1, 128], strides = [1, 1]} : vector<16x128xf32> to vector<1x128xf32>
    %cst_19 = arith.constant dense<0.000000e+00> : vector<128xf32>
    %37 = vector.multi_reduction <add>, %34, %cst_19 [0] : vector<8x128xf32> to vector<128xf32>
    %38 = vector.shape_cast %37 : vector<128xf32> to vector<1x128xf32>
    %39 = arith.mulf %34, %34 : vector<8x128xf32>
    %cst_20 = arith.constant dense<0.000000e+00> : vector<128xf32>
    %40 = vector.multi_reduction <add>, %39, %cst_20 [0] : vector<8x128xf32> to vector<128xf32>
    %41 = vector.shape_cast %40 : vector<128xf32> to vector<1x128xf32>
    %cst_21 = arith.constant 1.250000e-01 : f32
    %42 = vector.broadcast %cst_21 : f32 to vector<1x128xf32>
    %43 = arith.mulf %38, %42 : vector<1x128xf32>
    %cst_22 = arith.constant 1.250000e-01 : f32
    %44 = vector.broadcast %cst_22 : f32 to vector<1x128xf32>
    %45 = arith.mulf %41, %44 : vector<1x128xf32>
    %46 = arith.mulf %43, %43 : vector<1x128xf32>
    %47 = arith.subf %45, %46 : vector<1x128xf32>
    %cst_23 = arith.constant 9.99999974E-6 : f32
    %48 = vector.broadcast %cst_23 : f32 to vector<1x128xf32>
    %49 = arith.addf %47, %48 : vector<1x128xf32>
    %50 = math.rsqrt %49 : vector<1x128xf32>
    %51 = arith.mulf %35, %50 : vector<1x128xf32>
    %52 = arith.mulf %43, %51 : vector<1x128xf32>
    %53 = arith.subf %36, %52 : vector<1x128xf32>
    %54 = vector.broadcast %51 : vector<1x128xf32> to vector<8x128xf32>
    %55 = arith.mulf %34, %54 : vector<8x128xf32>
    %56 = vector.broadcast %53 : vector<1x128xf32> to vector<8x128xf32>
    %57 = arith.addf %55, %56 : vector<8x128xf32>
    %58 = math.tanh %57 : vector<8x128xf32>
    %59 = vector.extract_strided_slice %58 {offsets = [0, 0], sizes = [8, 104], strides = [1, 1]} : vector<8x128xf32> to vector<8x104xf32>
    %c88 = arith.constant 88 : index
    %c0_24 = arith.constant 0 : index
    %60 = vector.load %arg1[%c88, %c0_24] : memref<264x128xf32, #tpu.memory_space<vmem>>, vector<104x128xf32>
    %cst_25 = arith.constant dense<0.000000e+00> : vector<8x128xf32>
    %61 = tpu.matmul %59, %60, %cst_25 {dimension_numbers = #tpu.dot_dimension_numbers<[1], [0], [0], [1], [0, 0, 1, 1], [], []>} : vector<8x104xf32>, vector<104x128xf32>, vector<8x128xf32> -> vector<8x128xf32>
    %62 = vector.extract_strided_slice %0 {offsets = [2, 0], sizes = [1, 128], strides = [1, 1]} : vector<16x128xf32> to vector<1x128xf32>
    %63 = vector.extract_strided_slice %0 {offsets = [6, 0], sizes = [1, 128], strides = [1, 1]} : vector<16x128xf32> to vector<1x128xf32>
    %cst_26 = arith.constant dense<0.000000e+00> : vector<128xf32>
    %64 = vector.multi_reduction <add>, %61, %cst_26 [0] : vector<8x128xf32> to vector<128xf32>
    %65 = vector.shape_cast %64 : vector<128xf32> to vector<1x128xf32>
    %66 = arith.mulf %61, %61 : vector<8x128xf32>
    %cst_27 = arith.constant dense<0.000000e+00> : vector<128xf32>
    %67 = vector.multi_reduction <add>, %66, %cst_27 [0] : vector<8x128xf32> to vector<128xf32>
    %68 = vector.shape_cast %67 : vector<128xf32> to vector<1x128xf32>
    %cst_28 = arith.constant 1.250000e-01 : f32
    %69 = vector.broadcast %cst_28 : f32 to vector<1x128xf32>
    %70 = arith.mulf %65, %69 : vector<1x128xf32>
    %cst_29 = arith.constant 1.250000e-01 : f32
    %71 = vector.broadcast %cst_29 : f32 to vector<1x128xf32>
    %72 = arith.mulf %68, %71 : vector<1x128xf32>
    %73 = arith.mulf %70, %70 : vector<1x128xf32>
    %74 = arith.subf %72, %73 : vector<1x128xf32>
    %cst_30 = arith.constant 9.99999974E-6 : f32
    %75 = vector.broadcast %cst_30 : f32 to vector<1x128xf32>
    %76 = arith.addf %74, %75 : vector<1x128xf32>
    %77 = math.rsqrt %76 : vector<1x128xf32>
    %78 = arith.mulf %62, %77 : vector<1x128xf32>
    %79 = arith.mulf %70, %78 : vector<1x128xf32>
    %80 = arith.subf %63, %79 : vector<1x128xf32>
    %81 = vector.broadcast %78 : vector<1x128xf32> to vector<8x128xf32>
    %82 = arith.mulf %61, %81 : vector<8x128xf32>
    %83 = vector.broadcast %80 : vector<1x128xf32> to vector<8x128xf32>
    %84 = arith.addf %82, %83 : vector<8x128xf32>
    %85 = math.tanh %84 : vector<8x128xf32>
    %86 = vector.extract_strided_slice %85 {offsets = [0, 0], sizes = [8, 56], strides = [1, 1]} : vector<8x128xf32> to vector<8x56xf32>
    %c192 = arith.constant 192 : index
    %c0_31 = arith.constant 0 : index
    %87 = vector.load %arg1[%c192, %c0_31] : memref<264x128xf32, #tpu.memory_space<vmem>>, vector<56x128xf32>
    %cst_32 = arith.constant dense<0.000000e+00> : vector<8x128xf32>
    %88 = tpu.matmul %86, %87, %cst_32 {dimension_numbers = #tpu.dot_dimension_numbers<[1], [0], [0], [1], [0, 0, 1, 1], [], []>} : vector<8x56xf32>, vector<56x128xf32>, vector<8x128xf32> -> vector<8x128xf32>
    %89 = vector.extract_strided_slice %0 {offsets = [3, 0], sizes = [1, 128], strides = [1, 1]} : vector<16x128xf32> to vector<1x128xf32>
    %90 = vector.extract_strided_slice %0 {offsets = [7, 0], sizes = [1, 128], strides = [1, 1]} : vector<16x128xf32> to vector<1x128xf32>
    %cst_33 = arith.constant dense<0.000000e+00> : vector<128xf32>
    %91 = vector.multi_reduction <add>, %88, %cst_33 [0] : vector<8x128xf32> to vector<128xf32>
    %92 = vector.shape_cast %91 : vector<128xf32> to vector<1x128xf32>
    %93 = arith.mulf %88, %88 : vector<8x128xf32>
    %cst_34 = arith.constant dense<0.000000e+00> : vector<128xf32>
    %94 = vector.multi_reduction <add>, %93, %cst_34 [0] : vector<8x128xf32> to vector<128xf32>
    %95 = vector.shape_cast %94 : vector<128xf32> to vector<1x128xf32>
    %cst_35 = arith.constant 1.250000e-01 : f32
    %96 = vector.broadcast %cst_35 : f32 to vector<1x128xf32>
    %97 = arith.mulf %92, %96 : vector<1x128xf32>
    %cst_36 = arith.constant 1.250000e-01 : f32
    %98 = vector.broadcast %cst_36 : f32 to vector<1x128xf32>
    %99 = arith.mulf %95, %98 : vector<1x128xf32>
    %100 = arith.mulf %97, %97 : vector<1x128xf32>
    %101 = arith.subf %99, %100 : vector<1x128xf32>
    %cst_37 = arith.constant 9.99999974E-6 : f32
    %102 = vector.broadcast %cst_37 : f32 to vector<1x128xf32>
    %103 = arith.addf %101, %102 : vector<1x128xf32>
    %104 = math.rsqrt %103 : vector<1x128xf32>
    %105 = arith.mulf %89, %104 : vector<1x128xf32>
    %106 = arith.mulf %97, %105 : vector<1x128xf32>
    %107 = arith.subf %90, %106 : vector<1x128xf32>
    %108 = vector.broadcast %105 : vector<1x128xf32> to vector<8x128xf32>
    %109 = arith.mulf %88, %108 : vector<8x128xf32>
    %110 = vector.broadcast %107 : vector<1x128xf32> to vector<8x128xf32>
    %111 = arith.addf %109, %110 : vector<8x128xf32>
    %112 = math.tanh %111 : vector<8x128xf32>
    %113 = vector.extract_strided_slice %112 {offsets = [0, 0], sizes = [8, 16], strides = [1, 1]} : vector<8x128xf32> to vector<8x16xf32>
    %c248 = arith.constant 248 : index
    %c0_38 = arith.constant 0 : index
    %114 = vector.load %arg1[%c248, %c0_38] : memref<264x128xf32, #tpu.memory_space<vmem>>, vector<16x128xf32>
    %cst_39 = arith.constant dense<0.000000e+00> : vector<8x128xf32>
    %115 = tpu.matmul %113, %114, %cst_39 {dimension_numbers = #tpu.dot_dimension_numbers<[1], [0], [0], [1], [0, 0, 1, 1], [], []>} : vector<8x16xf32>, vector<16x128xf32>, vector<8x128xf32> -> vector<8x128xf32>
    %116 = vector.extract_strided_slice %0 {offsets = [8, 0], sizes = [1, 128], strides = [1, 1]} : vector<16x128xf32> to vector<1x128xf32>
    %117 = vector.broadcast %116 : vector<1x128xf32> to vector<8x128xf32>
    %118 = arith.addf %115, %117 : vector<8x128xf32>
    %c0_40 = arith.constant 0 : index
    %c0_41 = arith.constant 0 : index
    %119 = vector.load %arg3[%c0_40, %c0_41] : memref<8x128xf32, #tpu.memory_space<vmem>>, vector<8x128xf32>
    tpu.vector_store %arg3[%c0_40, %c0_41], %118 {strides = array<i32>} : memref<8x128xf32, #tpu.memory_space<vmem>>, vector<8x128xf32>,
    return
  }
}

</mosaic_0001>

<llo_original>
// kernel: simple_model_forward.1
$region0: #{simple_model_forward.1}
  #allocation0 [shape = 'u32[]', space=smem, size = 0x4, offset = 0x4, fixed_abs, tag = 'smem constant byte address 0x4 - core index']
  #allocation1 [shape = 'u32[144,128]{1,0:T(1,128)}', space=vmem, size = 0x12000, scoped, tag = 'internal scratch']
  #allocation2 [shape = 'f32[8,32]{1,0:T(8,128)}', space=vmem, size = 0x1000, scoped, tag = 'scratch operand']
  %s0 = inlined_call_operand.hbm [shape: f32[8,27], index: 0, kind: input, shape index: {}]
  %s1 = inlined_call_operand.hbm [shape: f32[264,128], index: 1, kind: input, shape index: {}]
  %s2 = inlined_call_operand.hbm [shape: f32[16,128], index: 2, kind: input, shape index: {}]
  %s3 = inlined_call_operand.vmem [shape: f32[8,128], index: 3, kind: output, shape index: {}]
  %s4 = sld [smem:[#allocation0]]
  $region34: #{simple_model_forward.1} parent=0
    _
  %s6 = ssub.s32 1, %s4
  %s7 = scalar_select 0, %s6, %s4
  $region1: #{simple_model_forward.1} parent=0
    #allocation3 [shape = 'u8[4096]{0}', space=vmem, size = 0x1000, scoped, tag = 'input window, operand 0, single buffered']
    #allocation4 [shape = 's32[1]{0}', space=sflag, size = 0x4, scoped, tag = 'scoped memory for simple_model_forward.1']
    #allocation5 [shape = 'u8[135168]{0}', space=vmem, size = 0x21000, scoped, tag = 'input window, operand 1, single buffered']
    #allocation6 [shape = 's32[1]{0}', space=sflag, size = 0x4, scoped, tag = 'scoped memory for simple_model_forward.1']
    #allocation7 [shape = 'u8[8192]{0}', space=vmem, size = 0x2000, scoped, tag = 'input window, operand 2, single buffered']
    %8 = vsyncpa [#allocation4], 0
    %9 = vsyncpa [#allocation6], 0
    // Predicated region
    $region2: #{simple_model_forward.1} parent=1 // pred_check
      _
    $region3: #{simple_model_forward.1} parent=1 // pred_check_branch
      %11 = sbr.rel (0) target = $region5
    $region4: #{simple_model_forward.1} parent=1 // pred_region
      %s13 = ssub.s32 128, 128
      %14 = vsyncadd [#allocation4], %s13
      %s16 = sshll.u32 [#allocation3], 4
      %s17 = int_to_ptr.vmem [resolvable:$true] %s16
      %19 = dma.hbm_to_vmem [thread:$0]  %s0, 128, %s17, [#allocation4]
    $region5: #{simple_model_forward.1} parent=1 // pred_fallthru
      _
    // Predicated region
    $region6: #{simple_model_forward.1} parent=1 // pred_check
      _
    $region7: #{simple_model_forward.1} parent=1 // pred_check_branch
      %21 = sbr.rel (0) target = $region9
    $region8: #{simple_model_forward.1} parent=1 // pred_region
      %s23 = ssub.s32 4224, 4224
      %24 = vsyncadd [#allocation6], %s23
      %s25 = sshll.u32 [#allocation5], 4
      %s26 = int_to_ptr.vmem [resolvable:$true] %s25
      %31 = dma.hbm_to_vmem [thread:$0]  %s1, 4224, %s26, [#allocation6], 128, 128, 8
    $region9: #{simple_model_forward.1} parent=1 // pred_fallthru
      _
    // Predicated region
    $region10: #{simple_model_forward.1} parent=1 // pred_check
      _
    $region11: #{simple_model_forward.1} parent=1 // pred_check_branch
      %33 = sbr.rel (0) target = $region13
    $region12: #{simple_model_forward.1} parent=1 // pred_region
      %s35 = ssub.s32 256, 256
      %36 = vsyncadd [#allocation6], %s35
      %s37 = sshll.u32 [#allocation7], 4
      %s38 = int_to_ptr.vmem [resolvable:$true] %s37
      %43 = dma.hbm_to_vmem [thread:$0]  %s2, 256, %s38, [#allocation6], 128, 128, 8
    $region13: #{simple_model_forward.1} parent=1 // pred_fallthru
      _
    // Predicated region
    $region14: #{simple_model_forward.1} parent=1 // pred_check
      _
    $region15: #{simple_model_forward.1} parent=1 // pred_check_branch
      %45 = sbr.rel (0) target = $region17
    $region16: #{simple_model_forward.1} parent=1 // pred_region
      %46 = dma.done [#allocation4], 128
    $region17: #{simple_model_forward.1} parent=1 // pred_fallthru
      _
    // Predicated region
    $region18: #{simple_model_forward.1} parent=1 // pred_check
      _
    $region19: #{simple_model_forward.1} parent=1 // pred_check_branch
      %48 = sbr.rel (0) target = $region21
    $region20: #{simple_model_forward.1} parent=1 // pred_region
      %49 = dma.done [#allocation6], 4224
    $region21: #{simple_model_forward.1} parent=1 // pred_fallthru
      _
    // Predicated region
    $region22: #{simple_model_forward.1} parent=1 // pred_check
      _
    $region23: #{simple_model_forward.1} parent=1 // pred_check_branch
      %51 = sbr.rel (0) target = $region25
    $region24: #{simple_model_forward.1} parent=1 // pred_region
      %52 = dma.done [#allocation6], 256
    $region25: #{simple_model_forward.1} parent=1 // pred_fallthru
      _
    %v53 = vld [vmem:[#allocation7] sm:$0xff]
    %v54 = vld [vmem:[#allocation7 + $0x8] sm:$0xff]
    %vm55 = vcmask 261120
    %56 = vst.msk [vmem:[#allocation2] sm:$0xff] %vm55, 0.0
    %v57 = vld [vmem:[#allocation3] sm:$0xff]
    %vm58 = vcmask 220160
    %59 = vst.msk [vmem:[#allocation2] sm:$0xff] %vm58, %v57
    %v60 = vld [vmem:[#allocation2] sm:$0xff]
    %v61 = vld [vmem:[#allocation5] sm:$0xff]
    %v62 = vld [vmem:[#allocation5 + $0x8] sm:$0xff]
    %v63 = vld [vmem:[#allocation5 + $0x10] sm:$0xff]
    %v64 = vld [vmem:[#allocation5 + $0x18] sm:$0xff]
    %v66 = vsel %vm55, %v60, 0
    %68 = vmatprep.subr.mxu0 0.0
    %69 = vmatpush1.msra.mxu0 %v61
    %70 = vmatprep.subr.mxu0 0.0
    %71 = vmatpush1.msra.mxu0 %v62
    %72 = vmatprep.subr.mxu0 0.0
    %73 = vmatpush1.msra.mxu0 %v63
    %74 = vmatprep.subr.mxu0 0.0
    %75 = vmatpush1.msra.mxu0 %v64
    %76 = vmatprep.subr.mxu0 0.0
    %77 = vmatpush1.msra.mxu0 0.0
    %78 = vmatprep.subr.mxu0 0.0
    %79 = vmatpush1.msra.mxu0 0.0
    %80 = vmatprep.subr.mxu0 0.0
    %81 = vmatpush1.msra.mxu0 0.0
    %82 = vmatprep.subr.mxu0 0.0
    %83 = vmatpush1.msra.mxu0 0.0
    %84 = vmatprep.subr.mxu0 0.0
    %85 = vmatpush1.msra.mxu0 0.0
    %86 = vmatprep.subr.mxu0 0.0
    %87 = vmatpush1.msra.mxu0 0.0
    %88 = vmatprep.subr.mxu0 0.0
    %89 = vmatpush1.msra.mxu0 0.0
    %90 = vmatprep.subr.mxu0 0.0
    %91 = vmatpush1.msra.mxu0 0.0
    %92 = vmatprep.subr.mxu0 0.0
    %93 = vmatpush1.msra.mxu0 0.0
    %94 = vmatprep.subr.mxu0 0.0
    %95 = vmatpush1.msra.mxu0 0.0
    %96 = vmatprep.subr.mxu0 0.0
    %97 = vmatpush1.msra.mxu0 0.0
    %98 = vmatprep.subr.mxu0 0.0
    %99 = vmatpush1.msra.mxu0 0.0
    %100 = vmatprep.subr.mxu0 0.0
    %101 = vmatpush1.msra.mxu0 0.0
    %102 = vmatprep.subr.mxu0 0.0
    %103 = vmatpush1.msra.mxu0 0.0
    %104 = vmatprep.subr.mxu0 0.0
    %105 = vmatpush1.msra.mxu0 0.0
    %106 = vmatprep.subr.mxu0 0.0
    %107 = vmatpush1.msra.mxu0 0.0
    %108 = vmatprep.subr.mxu0 0.0
    %109 = vmatpush1.msra.mxu0 0.0
    %110 = vmatprep.subr.mxu0 0.0
    %111 = vmatpush1.msra.mxu0 0.0
    %112 = vmatprep.subr.mxu0 0.0
    %113 = vmatpush1.msra.mxu0 0.0
    %114 = vmatprep.subr.mxu0 0.0
    %115 = vmatpush1.msra.mxu0 0.0
    %116 = vmatprep.subr.mxu0 0.0
    %117 = vmatpush1.msra.mxu0 0.0
    %118 = vmatprep.subr.mxu0 0.0
    %119 = vmatpush1.msra.mxu0 0.0
    %120 = vmatprep.subr.mxu0 0.0
    %121 = vmatpush1.msra.mxu0 0.0
    %122 = vmatprep.subr.mxu0 0.0
    %123 = vmatpush1.msra.mxu0 0.0
    %124 = vmatprep.subr.mxu0 0.0
    %125 = vmatpush1.msra.mxu0 0.0
    %126 = vmatprep.subr.mxu0 0.0
    %127 = vmatpush1.msra.mxu0 0.0
    %128 = vmatprep.subr.mxu0 0.0
    %129 = vmatpush1.msra.mxu0 0.0
    %130 = vmatprep.subr.mxu0 0.0
    %131 = vmatpush1.msra.mxu0 0.0
    %132 = vmatprep.mubr.f32.mxu0 0.0
    %133 = vmatmul.mubr.f32.gmra.mrb[0].mxu0 %v66
    %v134 = vpop.f32.mrb[0].mxu0
    %v135 = vadd.f32 0.0, %v134
    %v136 = vpop.f32.mrb[0].mxu0
    %137 = vdwg.mxu0
    %v138 = vrot.slane %v135, 4
    %v139 = vadd.f32 %v135, %v138
    %v140 = vrot.slane %v139, 2
    %v141 = vadd.f32 %v139, %v140
    %v142 = vrot.slane %v141, 1
    %v143 = vadd.f32 %v141, %v142
    %v144 = vmul.f32 %v135, %v135
    %v145 = vrot.slane %v144, 4
    %v146 = vadd.f32 %v144, %v145
    %v147 = vrot.slane %v146, 2
    %v148 = vadd.f32 %v146, %v147
    %v149 = vrot.slane %v148, 1
    %v150 = vadd.f32 %v148, %v149
    %v151 = vmul.f32 %v143, 0.125
    %v152 = vmul.f32 %v150, 0.125
    %v153 = vmul.f32 %v151, %v151
    %v154 = vsub.f32 %v152, %v153
    %v155 = vadd.f32 %v154, 1e-05
    %v156 = vrsqrt.pop %v155
    %v157 = vmul.f32 %v53, %v156
    %v158 = vmul.f32 %v151, %v157
    %v160 = vrot.slane %v158, 4
    %v162 = vsub.f32 %v53, %v160
    %v163 = vlaneseq
    %v164 = vshrl.u32 %v163, 7
    %v165 = vsub.s32 0, %v164
    %v166 = vrot.slane %v157, %v165
    %v167 = vmul.f32 %v135, %v166
    %v168 = vlaneseq
    %v169 = vshrl.u32 %v168, 7
    %v170 = vsub.s32 4, %v169
    %v171 = vrot.slane %v162, %v170
    %v172 = vadd.f32 %v167, %v171
    %v173 = vtanh.pop %v172
    %v174 = vld [vmem:[#allocation5 + $0x20] sm:$0xff]
    %v175 = vld [vmem:[#allocation5 + $0x28] sm:$0xff]
    %v176 = vld [vmem:[#allocation5 + $0x30] sm:$0xff]
    %v177 = vld [vmem:[#allocation5 + $0x38] sm:$0xff]
    %v178 = vld [vmem:[#allocation5 + $0x40] sm:$0xff]
    %v179 = vld [vmem:[#allocation5 + $0x48] sm:$0xff]
    %v180 = vld [vmem:[#allocation5 + $0x50] sm:$0xff]
    %vm181 = vcmask 457728
    %v183 = vsel %vm181, %v173, 0
    %185 = vmatprep.subr.mxu0 0.0
    %186 = vmatpush1.msra.mxu0 %v174
    %187 = vmatprep.subr.mxu0 0.0
    %188 = vmatpush1.msra.mxu0 %v175
    %189 = vmatprep.subr.mxu0 0.0
    %190 = vmatpush1.msra.mxu0 %v176
    %191 = vmatprep.subr.mxu0 0.0
    %192 = vmatpush1.msra.mxu0 %v177
    %193 = vmatprep.subr.mxu0 0.0
    %194 = vmatpush1.msra.mxu0 %v178
    %195 = vmatprep.subr.mxu0 0.0
    %196 = vmatpush1.msra.mxu0 %v179
    %197 = vmatprep.subr.mxu0 0.0
    %198 = vmatpush1.msra.mxu0 %v180
    %199 = vmatprep.subr.mxu0 0.0
    %200 = vmatpush1.msra.mxu0 0.0
    %201 = vmatprep.subr.mxu0 0.0
    %202 = vmatpush1.msra.mxu0 0.0
    %203 = vmatprep.subr.mxu0 0.0
    %204 = vmatpush1.msra.mxu0 0.0
    %205 = vmatprep.subr.mxu0 0.0
    %206 = vmatpush1.msra.mxu0 0.0
    %207 = vmatprep.subr.mxu0 0.0
    %208 = vmatpush1.msra.mxu0 0.0
    %209 = vmatprep.subr.mxu0 0.0
    %210 = vmatpush1.msra.mxu0 0.0
    %211 = vmatprep.subr.mxu0 0.0
    %212 = vmatpush1.msra.mxu0 0.0
    %213 = vmatprep.subr.mxu0 0.0
    %214 = vmatpush1.msra.mxu0 0.0
    %215 = vmatprep.subr.mxu0 0.0
    %216 = vmatpush1.msra.mxu0 0.0
    %217 = vmatprep.subr.mxu0 0.0
    %218 = vmatpush1.msra.mxu0 0.0
    %219 = vmatprep.subr.mxu0 0.0
    %220 = vmatpush1.msra.mxu0 0.0
    %221 = vmatprep.subr.mxu0 0.0
    %222 = vmatpush1.msra.mxu0 0.0
    %223 = vmatprep.subr.mxu0 0.0
    %224 = vmatpush1.msra.mxu0 0.0
    %225 = vmatprep.subr.mxu0 0.0
    %226 = vmatpush1.msra.mxu0 0.0
    %227 = vmatprep.subr.mxu0 0.0
    %228 = vmatpush1.msra.mxu0 0.0
    %229 = vmatprep.subr.mxu0 0.0
    %230 = vmatpush1.msra.mxu0 0.0
    %231 = vmatprep.subr.mxu0 0.0
    %232 = vmatpush1.msra.mxu0 0.0
    %233 = vmatprep.subr.mxu0 0.0
    %234 = vmatpush1.msra.mxu0 0.0
    %235 = vmatprep.subr.mxu0 0.0
    %236 = vmatpush1.msra.mxu0 0.0
    %237 = vmatprep.subr.mxu0 0.0
    %238 = vmatpush1.msra.mxu0 0.0
    %239 = vmatprep.subr.mxu0 0.0
    %240 = vmatpush1.msra.mxu0 0.0
    %241 = vmatprep.subr.mxu0 0.0
    %242 = vmatpush1.msra.mxu0 0.0
    %243 = vmatprep.subr.mxu0 0.0
    %244 = vmatpush1.msra.mxu0 0.0
    %245 = vmatprep.subr.mxu0 0.0
    %246 = vmatpush1.msra.mxu0 0.0
    %247 = vmatprep.subr.mxu0 0.0
    %248 = vmatpush1.msra.mxu0 0.0
    %249 = vmatprep.mubr.f32.mxu0 0.0
    %250 = vmatmul.mubr.f32.gmra.mrb[0].mxu0 %v183
    %v251 = vpop.f32.mrb[0].mxu0
    %v252 = vadd.f32 0.0, %v251
    %v253 = vpop.f32.mrb[0].mxu0
    %254 = vdwg.mxu0
    %v255 = vrot.slane %v252, 4
    %v256 = vadd.f32 %v252, %v255
    %v257 = vrot.slane %v256, 2
    %v258 = vadd.f32 %v256, %v257
    %v259 = vrot.slane %v258, 1
    %v260 = vadd.f32 %v258, %v259
    %v261 = vmul.f32 %v252, %v252
    %v262 = vrot.slane %v261, 4
    %v263 = vadd.f32 %v261, %v262
    %v264 = vrot.slane %v263, 2
    %v265 = vadd.f32 %v263, %v264
    %v266 = vrot.slane %v265, 1
    %v267 = vadd.f32 %v265, %v266
    %v268 = vmul.f32 %v260, 0.125
    %v269 = vmul.f32 %v267, 0.125
    %v270 = vmul.f32 %v268, %v268
    %v271 = vsub.f32 %v269, %v270
    %v272 = vadd.f32 %v271, 1e-05
    %v273 = vrsqrt.pop %v272
    %v274 = vmul.f32 %v53, %v273
    %v275 = vmul.f32 %v268, %v274
    %v277 = vrot.slane %v275, 4
    %v279 = vsub.f32 %v53, %v277
    %v280 = vlaneseq
    %v281 = vshrl.u32 %v280, 7
    %v282 = vsub.s32 1, %v281
    %v283 = vrot.slane %v274, %v282
    %v284 = vmul.f32 %v252, %v283
    %v285 = vlaneseq
    %v286 = vshrl.u32 %v285, 7
    %v287 = vsub.s32 5, %v286
    %v288 = vrot.slane %v279, %v287
    %v289 = vadd.f32 %v284, %v288
    %v290 = vtanh.pop %v289
    %v291 = vld [vmem:[#allocation5 + $0x58] sm:$0xff]
    %v292 = vld [vmem:[#allocation5 + $0x60] sm:$0xff]
    %v293 = vld [vmem:[#allocation5 + $0x68] sm:$0xff]
    %v294 = vld [vmem:[#allocation5 + $0x70] sm:$0xff]
    %v295 = vld [vmem:[#allocation5 + $0x78] sm:$0xff]
    %v296 = vld [vmem:[#allocation5 + $0x80] sm:$0xff]
    %v297 = vld [vmem:[#allocation5 + $0x88] sm:$0xff]
    %v298 = vld [vmem:[#allocation5 + $0x90] sm:$0xff]
    %v299 = vld [vmem:[#allocation5 + $0x98] sm:$0xff]
    %v300 = vld [vmem:[#allocation5 + $0xa0] sm:$0xff]
    %v301 = vld [vmem:[#allocation5 + $0xa8] sm:$0xff]
    %v302 = vld [vmem:[#allocation5 + $0xb0] sm:$0xff]
    %v303 = vld [vmem:[#allocation5 + $0xb8] sm:$0xff]
    %vm304 = vcmask 850944
    %v306 = vsel %vm304, %v290, 0
    %308 = vmatprep.subr.mxu0 0.0
    %309 = vmatpush1.msra.mxu0 %v291
    %310 = vmatprep.subr.mxu0 0.0
    %311 = vmatpush1.msra.mxu0 %v292
    %312 = vmatprep.subr.mxu0 0.0
    %313 = vmatpush1.msra.mxu0 %v293
    %314 = vmatprep.subr.mxu0 0.0
    %315 = vmatpush1.msra.mxu0 %v294
    %316 = vmatprep.subr.mxu0 0.0
    %317 = vmatpush1.msra.mxu0 %v295
    %318 = vmatprep.subr.mxu0 0.0
    %319 = vmatpush1.msra.mxu0 %v296
    %320 = vmatprep.subr.mxu0 0.0
    %321 = vmatpush1.msra.mxu0 %v297
    %322 = vmatprep.subr.mxu0 0.0
    %323 = vmatpush1.msra.mxu0 %v298
    %324 = vmatprep.subr.mxu0 0.0
    %325 = vmatpush1.msra.mxu0 %v299
    %326 = vmatprep.subr.mxu0 0.0
    %327 = vmatpush1.msra.mxu0 %v300
    %328 = vmatprep.subr.mxu0 0.0
    %329 = vmatpush1.msra.mxu0 %v301
    %330 = vmatprep.subr.mxu0 0.0
    %331 = vmatpush1.msra.mxu0 %v302
    %332 = vmatprep.subr.mxu0 0.0
    %333 = vmatpush1.msra.mxu0 %v303
    %334 = vmatprep.subr.mxu0 0.0
    %335 = vmatpush1.msra.mxu0 0.0
    %336 = vmatprep.subr.mxu0 0.0
    %337 = vmatpush1.msra.mxu0 0.0
    %338 = vmatprep.subr.mxu0 0.0
    %339 = vmatpush1.msra.mxu0 0.0
    %340 = vmatprep.subr.mxu0 0.0
    %341 = vmatpush1.msra.mxu0 0.0
    %342 = vmatprep.subr.mxu0 0.0
    %343 = vmatpush1.msra.mxu0 0.0
    %344 = vmatprep.subr.mxu0 0.0
    %345 = vmatpush1.msra.mxu0 0.0
    %346 = vmatprep.subr.mxu0 0.0
    %347 = vmatpush1.msra.mxu0 0.0
    %348 = vmatprep.subr.mxu0 0.0
    %349 = vmatpush1.msra.mxu0 0.0
    %350 = vmatprep.subr.mxu0 0.0
    %351 = vmatpush1.msra.mxu0 0.0
    %352 = vmatprep.subr.mxu0 0.0
    %353 = vmatpush1.msra.mxu0 0.0
    %354 = vmatprep.subr.mxu0 0.0
    %355 = vmatpush1.msra.mxu0 0.0
    %356 = vmatprep.subr.mxu0 0.0
    %357 = vmatpush1.msra.mxu0 0.0
    %358 = vmatprep.subr.mxu0 0.0
    %359 = vmatpush1.msra.mxu0 0.0
    %360 = vmatprep.subr.mxu0 0.0
    %361 = vmatpush1.msra.mxu0 0.0
    %362 = vmatprep.subr.mxu0 0.0
    %363 = vmatpush1.msra.mxu0 0.0
    %364 = vmatprep.subr.mxu0 0.0
    %365 = vmatpush1.msra.mxu0 0.0
    %366 = vmatprep.subr.mxu0 0.0
    %367 = vmatpush1.msra.mxu0 0.0
    %368 = vmatprep.subr.mxu0 0.0
    %369 = vmatpush1.msra.mxu0 0.0
    %370 = vmatprep.subr.mxu0 0.0
    %371 = vmatpush1.msra.mxu0 0.0
    %372 = vmatprep.mubr.f32.mxu0 0.0
    %373 = vmatmul.mubr.f32.gmra.mrb[0].mxu0 %v306
    %v374 = vpop.f32.mrb[0].mxu0
    %v375 = vadd.f32 0.0, %v374
    %v376 = vpop.f32.mrb[0].mxu0
    %377 = vdwg.mxu0
    %v378 = vrot.slane %v375, 4
    %v379 = vadd.f32 %v375, %v378
    %v380 = vrot.slane %v379, 2
    %v381 = vadd.f32 %v379, %v380
    %v382 = vrot.slane %v381, 1
    %v383 = vadd.f32 %v381, %v382
    %v384 = vmul.f32 %v375, %v375
    %v385 = vrot.slane %v384, 4
    %v386 = vadd.f32 %v384, %v385
    %v387 = vrot.slane %v386, 2
    %v388 = vadd.f32 %v386, %v387
    %v389 = vrot.slane %v388, 1
    %v390 = vadd.f32 %v388, %v389
    %v391 = vmul.f32 %v383, 0.125
    %v392 = vmul.f32 %v390, 0.125
    %v393 = vmul.f32 %v391, %v391
    %v394 = vsub.f32 %v392, %v393
    %v395 = vadd.f32 %v394, 1e-05
    %v396 = vrsqrt.pop %v395
    %v397 = vmul.f32 %v53, %v396
    %v398 = vmul.f32 %v391, %v397
    %v400 = vrot.slane %v398, 4
    %v402 = vsub.f32 %v53, %v400
    %v403 = vlaneseq
    %v404 = vshrl.u32 %v403, 7
    %v405 = vsub.s32 2, %v404
    %v406 = vrot.slane %v397, %v405
    %v407 = vmul.f32 %v375, %v406
    %v408 = vlaneseq
    %v409 = vshrl.u32 %v408, 7
    %v410 = vsub.s32 6, %v409
    %v411 = vrot.slane %v402, %v410
    %v412 = vadd.f32 %v407, %v411
    %v413 = vtanh.pop %v412
    %v414 = vld [vmem:[#allocation5 + $0xc0] sm:$0xff]
    %v415 = vld [vmem:[#allocation5 + $0xc8] sm:$0xff]
    %v416 = vld [vmem:[#allocation5 + $0xd0] sm:$0xff]
    %v417 = vld [vmem:[#allocation5 + $0xd8] sm:$0xff]
    %v418 = vld [vmem:[#allocation5 + $0xe0] sm:$0xff]
    %v419 = vld [vmem:[#allocation5 + $0xe8] sm:$0xff]
    %v420 = vld [vmem:[#allocation5 + $0xf0] sm:$0xff]
    %v422 = vsel %vm181, %v413, 0
    %424 = vmatprep.subr.mxu0 0.0
    %425 = vmatpush1.msra.mxu0 %v414
    %426 = vmatprep.subr.mxu0 0.0
    %427 = vmatpush1.msra.mxu0 %v415
    %428 = vmatprep.subr.mxu0 0.0
    %429 = vmatpush1.msra.mxu0 %v416
    %430 = vmatprep.subr.mxu0 0.0
    %431 = vmatpush1.msra.mxu0 %v417
    %432 = vmatprep.subr.mxu0 0.0
    %433 = vmatpush1.msra.mxu0 %v418
    %434 = vmatprep.subr.mxu0 0.0
    %435 = vmatpush1.msra.mxu0 %v419
    %436 = vmatprep.subr.mxu0 0.0
    %437 = vmatpush1.msra.mxu0 %v420
    %438 = vmatprep.subr.mxu0 0.0
    %439 = vmatpush1.msra.mxu0 0.0
    %440 = vmatprep.subr.mxu0 0.0
    %441 = vmatpush1.msra.mxu0 0.0
    %442 = vmatprep.subr.mxu0 0.0
    %443 = vmatpush1.msra.mxu0 0.0
    %444 = vmatprep.subr.mxu0 0.0
    %445 = vmatpush1.msra.mxu0 0.0
    %446 = vmatprep.subr.mxu0 0.0
    %447 = vmatpush1.msra.mxu0 0.0
    %448 = vmatprep.subr.mxu0 0.0
    %449 = vmatpush1.msra.mxu0 0.0
    %450 = vmatprep.subr.mxu0 0.0
    %451 = vmatpush1.msra.mxu0 0.0
    %452 = vmatprep.subr.mxu0 0.0
    %453 = vmatpush1.msra.mxu0 0.0
    %454 = vmatprep.subr.mxu0 0.0
    %455 = vmatpush1.msra.mxu0 0.0
    %456 = vmatprep.subr.mxu0 0.0
    %457 = vmatpush1.msra.mxu0 0.0
    %458 = vmatprep.subr.mxu0 0.0
    %459 = vmatpush1.msra.mxu0 0.0
    %460 = vmatprep.subr.mxu0 0.0
    %461 = vmatpush1.msra.mxu0 0.0
    %462 = vmatprep.subr.mxu0 0.0
    %463 = vmatpush1.msra.mxu0 0.0
    %464 = vmatprep.subr.mxu0 0.0
    %465 = vmatpush1.msra.mxu0 0.0
    %466 = vmatprep.subr.mxu0 0.0
    %467 = vmatpush1.msra.mxu0 0.0
    %468 = vmatprep.subr.mxu0 0.0
    %469 = vmatpush1.msra.mxu0 0.0
    %470 = vmatprep.subr.mxu0 0.0
    %471 = vmatpush1.msra.mxu0 0.0
    %472 = vmatprep.subr.mxu0 0.0
    %473 = vmatpush1.msra.mxu0 0.0
    %474 = vmatprep.subr.mxu0 0.0
    %475 = vmatpush1.msra.mxu0 0.0
    %476 = vmatprep.subr.mxu0 0.0
    %477 = vmatpush1.msra.mxu0 0.0
    %478 = vmatprep.subr.mxu0 0.0
    %479 = vmatpush1.msra.mxu0 0.0
    %480 = vmatprep.subr.mxu0 0.0
    %481 = vmatpush1.msra.mxu0 0.0
    %482 = vmatprep.subr.mxu0 0.0
    %483 = vmatpush1.msra.mxu0 0.0
    %484 = vmatprep.subr.mxu0 0.0
    %485 = vmatpush1.msra.mxu0 0.0
    %486 = vmatprep.subr.mxu0 0.0
    %487 = vmatpush1.msra.mxu0 0.0
    %488 = vmatprep.mubr.f32.mxu0 0.0
    %489 = vmatmul.mubr.f32.gmra.mrb[0].mxu0 %v422
    %v490 = vpop.f32.mrb[0].mxu0
    %v491 = vadd.f32 0.0, %v490
    %v492 = vpop.f32.mrb[0].mxu0
    %493 = vdwg.mxu0
    %v494 = vrot.slane %v491, 4
    %v495 = vadd.f32 %v491, %v494
    %v496 = vrot.slane %v495, 2
    %v497 = vadd.f32 %v495, %v496
    %v498 = vrot.slane %v497, 1
    %v499 = vadd.f32 %v497, %v498
    %v500 = vmul.f32 %v491, %v491
    %v501 = vrot.slane %v500, 4
    %v502 = vadd.f32 %v500, %v501
    %v503 = vrot.slane %v502, 2
    %v504 = vadd.f32 %v502, %v503
    %v505 = vrot.slane %v504, 1
    %v506 = vadd.f32 %v504, %v505
    %v507 = vmul.f32 %v499, 0.125
    %v508 = vmul.f32 %v506, 0.125
    %v509 = vmul.f32 %v507, %v507
    %v510 = vsub.f32 %v508, %v509
    %v511 = vadd.f32 %v510, 1e-05
    %v512 = vrsqrt.pop %v511
    %v513 = vmul.f32 %v53, %v512
    %v514 = vmul.f32 %v507, %v513
    %v516 = vrot.slane %v514, 4
    %v518 = vsub.f32 %v53, %v516
    %v519 = vlaneseq
    %v520 = vshrl.u32 %v519, 7
    %v521 = vsub.s32 3, %v520
    %v522 = vrot.slane %v513, %v521
    %v523 = vmul.f32 %v491, %v522
    %v524 = vlaneseq
    %v525 = vshrl.u32 %v524, 7
    %v526 = vsub.s32 7, %v525
    %v527 = vrot.slane %v518, %v526
    %v528 = vadd.f32 %v523, %v527
    %v529 = vtanh.pop %v528
    %v530 = vld [vmem:[#allocation5 + $0xf8] sm:$0xff]
    %v531 = vld [vmem:[#allocation5 + $0x100] sm:$0xff]
    %v532 = vlaneseq
    %v533 = vshrl.u32 %v532, 7
    %v534 = vsub.s32 0, %v533
    %v535 = vrot.slane %v54, %v534
    %vm536 = vcmask 130048
    %v538 = vsel %vm536, %v529, 0
    %540 = vmatprep.subr.mxu0 0.0
    %541 = vmatpush1.msra.mxu0 %v530
    %542 = vmatprep.subr.mxu0 0.0
    %543 = vmatpush1.msra.mxu0 %v531
    %544 = vmatprep.subr.mxu0 0.0
    %545 = vmatpush1.msra.mxu0 0.0
    %546 = vmatprep.subr.mxu0 0.0
    %547 = vmatpush1.msra.mxu0 0.0
    %548 = vmatprep.subr.mxu0 0.0
    %549 = vmatpush1.msra.mxu0 0.0
    %550 = vmatprep.subr.mxu0 0.0
    %551 = vmatpush1.msra.mxu0 0.0
    %552 = vmatprep.subr.mxu0 0.0
    %553 = vmatpush1.msra.mxu0 0.0
    %554 = vmatprep.subr.mxu0 0.0
    %555 = vmatpush1.msra.mxu0 0.0
    %556 = vmatprep.subr.mxu0 0.0
    %557 = vmatpush1.msra.mxu0 0.0
    %558 = vmatprep.subr.mxu0 0.0
    %559 = vmatpush1.msra.mxu0 0.0
    %560 = vmatprep.subr.mxu0 0.0
    %561 = vmatpush1.msra.mxu0 0.0
    %562 = vmatprep.subr.mxu0 0.0
    %563 = vmatpush1.msra.mxu0 0.0
    %564 = vmatprep.subr.mxu0 0.0
    %565 = vmatpush1.msra.mxu0 0.0
    %566 = vmatprep.subr.mxu0 0.0
    %567 = vmatpush1.msra.mxu0 0.0
    %568 = vmatprep.subr.mxu0 0.0
    %569 = vmatpush1.msra.mxu0 0.0
    %570 = vmatprep.subr.mxu0 0.0
    %571 = vmatpush1.msra.mxu0 0.0
    %572 = vmatprep.subr.mxu0 0.0
    %573 = vmatpush1.msra.mxu0 0.0
    %574 = vmatprep.subr.mxu0 0.0
    %575 = vmatpush1.msra.mxu0 0.0
    %576 = vmatprep.subr.mxu0 0.0
    %577 = vmatpush1.msra.mxu0 0.0
    %578 = vmatprep.subr.mxu0 0.0
    %579 = vmatpush1.msra.mxu0 0.0
    %580 = vmatprep.subr.mxu0 0.0
    %581 = vmatpush1.msra.mxu0 0.0
    %582 = vmatprep.subr.mxu0 0.0
    %583 = vmatpush1.msra.mxu0 0.0
    %584 = vmatprep.subr.mxu0 0.0
    %585 = vmatpush1.msra.mxu0 0.0
    %586 = vmatprep.subr.mxu0 0.0
    %587 = vmatpush1.msra.mxu0 0.0
    %588 = vmatprep.subr.mxu0 0.0
    %589 = vmatpush1.msra.mxu0 0.0
    %590 = vmatprep.subr.mxu0 0.0
    %591 = vmatpush1.msra.mxu0 0.0
    %592 = vmatprep.subr.mxu0 0.0
    %593 = vmatpush1.msra.mxu0 0.0
    %594 = vmatprep.subr.mxu0 0.0
    %595 = vmatpush1.msra.mxu0 0.0
    %596 = vmatprep.subr.mxu0 0.0
    %597 = vmatpush1.msra.mxu0 0.0
    %598 = vmatprep.subr.mxu0 0.0
    %599 = vmatpush1.msra.mxu0 0.0
    %600 = vmatprep.subr.mxu0 0.0
    %601 = vmatpush1.msra.mxu0 0.0
    %602 = vmatprep.subr.mxu0 0.0
    %603 = vmatpush1.msra.mxu0 0.0
    %604 = vmatprep.mubr.f32.mxu0 0.0
    %605 = vmatmul.mubr.f32.gmra.mrb[0].mxu0 %v538
    %v606 = vpop.f32.mrb[0].mxu0
    %v607 = vadd.f32 %v535, %v606
    %v608 = vpop.f32.mrb[0].mxu0
    %609 = vdwg.mxu0
    %610 = vst [vmem:[%s3] sm:$0xff] %v607
    // Predicated region
    $region26: #{simple_model_forward.1} parent=1 // pred_check
      _
    $region27: #{simple_model_forward.1} parent=1 // pred_check_branch
      %612 = sbr.rel (0) target = $region29
    $region28: #{simple_model_forward.1} parent=1 // pred_region
      _
    $region29: #{simple_model_forward.1} parent=1 // pred_fallthru
      _
    // Predicated region
    $region30: #{simple_model_forward.1} parent=1 // pred_check
      _
    $region31: #{simple_model_forward.1} parent=1 // pred_check_branch
      %614 = sbr.rel (0) target = $region33
    $region32: #{simple_model_forward.1} parent=1 // pred_region
      _
    $region33: #{simple_model_forward.1} parent=1 // pred_fallthru
      _
    %615 = vsyncpa [#allocation4], 1
    %616 = vsyncpa [#allocation6], 1

</llo_original>
